<compile_context>
chip_gen: v6e
topology: v6e:2x2x1
jax: 0.10.0
libtpu: 0.0.40
codegen_flags: <defaults>
</compile_context>

<pallas_src>
import numpy as np
import jax
import jax.numpy as jnp
from jax.experimental import pallas as pl
from jax.experimental.pallas import tpu as pltpu


def _make_get_scalars_kernel(num_channels, max_l):
    C, L = num_channels, max_l

    def kernel(p0_ref, x_ref, out_ref):
        # p0_ref : (C, A)            raw row-major reshape of parts[0]
        # x_ref  : ((L+1)^2 * C, A)  fused per-degree data; row = l*l*C + m*C + c, lane = atom
        # out_ref: (C + (L+1)*C*C, A)
        x = x_ref[...]
        rows = [p0_ref[...]]                         # part-0 rows first (matches torch.cat order)

        for l in range(L + 1):
            base = l * l * C                         # static offset of degree l inside fused input
            x0 = x[base:base + C, :]                 # (C, A), m = 0 term
            acc = x0[:, None, :] * x0[None, :, :]    # (C, C, A)
            for m in range(1, 2 * l + 1):            # exactly 2l+1 terms -- no padded rows
                xm = x[base + m * C: base + (m + 1) * C, :]
                acc = acc + xm[:, None, :] * xm[None, :, :]
            for c1 in range(C):
                rows.append(acc[c1])                 # (C, A) row-block: c2 on sublanes

        # Single store of the whole (R, A) slab (one vst instead of 13 masked partial stores).
        out_ref[...] = jnp.concatenate(rows, axis=0)

    return kernel


def get_scalars(parts, num_atoms, num_channels, max_l):
    """parts: list of length max_l+1; parts[l] holds A*(2l+1)*C float32 values."""
    A, C, L = num_atoms, num_channels, max_l
    S = (L + 1) ** 2                                 # sum_l (2l+1)
    R = C + (L + 1) * C * C

    # part-0 rows: raw row-major reshape (no transpose), exactly as in torch.
    p0 = jnp.reshape(parts[0], (C, A)).astype(jnp.float32)

    # Fused per-degree input: ONE concat + ONE transpose in the wrapper.
    #   x_fused[l*l*C + m*C + c, a] = V_l[a, m, c]
    x_fused = jnp.concatenate(
        [jnp.reshape(parts[l], (A, (2 * l + 1) * C)) for l in range(L + 1)],
        axis=1).astype(jnp.float32).T                # (S*C, A)

    cost = pl.CostEstimate(
        flops=2 * A * C * C * S,
        transcendentals=0,
        bytes_accessed=4 * (C * A + S * C * A + R * A))

    out = pl.pallas_call(
        _make_get_scalars_kernel(C, L),
        out_shape=jax.ShapeDtypeStruct((R, A), jnp.float32),
        # No grid: whole arrays live in VMEM as single full blocks (one DMA each,
        # no pipelining setup for a problem this small).
        in_specs=[pl.BlockSpec(memory_space=pltpu.MemorySpace.VMEM),
                  pl.BlockSpec(memory_space=pltpu.MemorySpace.VMEM)],
        out_specs=pl.BlockSpec(memory_space=pltpu.MemorySpace.VMEM),
        cost_estimate=cost,
    )(p0, x_fused)
    return out


def _reference(parts, A, C, L):
    p0 = np.asarray(parts[0]).reshape(C, A).astype(np.float32)
    norm = np.zeros(((L + 1) * C * C, A), np.float32)
    cnt = 0
    for l in range(L + 1):
        v = np.asarray(parts[l]).reshape(A, 2 * l + 1, C).astype(np.float32)
        for c1 in range(C):
            for c2 in range(C):
                norm[cnt] = np.sum(v[:, :, c1] * v[:, :, c2], axis=1)
                cnt += 1
    return np.concatenate([p0, norm], axis=0)


if __name__ == "__main__":
    num_atoms, num_channels, max_l = 8, 4, 2

    key = jax.random.PRNGKey(0)
    parts = []
    for l in range(max_l + 1):
        key, sub = jax.random.split(key)
        # SO3vecArr-style part shape: (batch=1, num_atoms, 2l+1, num_channels)
        parts.append(jax.random.normal(
            sub, (1, num_atoms, 2 * l + 1, num_channels), dtype=jnp.float32))

    scalars = get_scalars(parts, num_atoms, num_channels, max_l)
    scalars = jax.block_until_ready(scalars)

    ref = _reference(parts, num_atoms, num_channels, max_l)
    assert scalars.shape == ref.shape, (scalars.shape, ref.shape)
    np.testing.assert_allclose(np.asarray(scalars), ref, rtol=1e-5, atol=1e-5)

    print("KERNEL_OK")
</pallas_src>

<mosaic_0001>
module attributes {stable_mosaic.version = 11 : i64} {
  func.func @kernel(%arg0: memref<4x8xf32, #tpu.memory_space<vmem>>, %arg1: memref<36x8xf32, #tpu.memory_space<vmem>>, %arg2: memref<52x8xf32, #tpu.memory_space<vmem>>) attributes {dimension_semantics = [], scalar_prefetch = 0 : i64, scratch_operands = 0 : i64, tpu.core_type = #tpu.core_type<tc>} {
    %c0 = arith.constant 0 : index
    %c0_0 = arith.constant 0 : index
    %0 = vector.load %arg1[%c0, %c0_0] : memref<36x8xf32, #tpu.memory_space<vmem>>, vector<36x8xf32>
    %c0_1 = arith.constant 0 : index
    %c0_2 = arith.constant 0 : index
    %1 = vector.load %arg0[%c0_1, %c0_2] : memref<4x8xf32, #tpu.memory_space<vmem>>, vector<4x8xf32>
    %2 = vector.extract_strided_slice %0 {offsets = [0, 0], sizes = [4, 8], strides = [1, 1]} : vector<36x8xf32> to vector<4x8xf32>
    %3 = vector.shape_cast %2 : vector<4x8xf32> to vector<4x1x8xf32>
    %4 = vector.shape_cast %2 : vector<4x8xf32> to vector<1x4x8xf32>
    %5 = vector.broadcast %3 : vector<4x1x8xf32> to vector<4x4x8xf32>
    %6 = vector.broadcast %4 : vector<1x4x8xf32> to vector<4x4x8xf32>
    %7 = arith.mulf %5, %6 : vector<4x4x8xf32>
    %8 = vector.extract_strided_slice %7 {offsets = [0, 0, 0], sizes = [1, 4, 8], strides = [1, 1, 1]} : vector<4x4x8xf32> to vector<1x4x8xf32>
    %9 = vector.shape_cast %8 : vector<1x4x8xf32> to vector<4x8xf32>
    %10 = vector.extract_strided_slice %7 {offsets = [1, 0, 0], sizes = [1, 4, 8], strides = [1, 1, 1]} : vector<4x4x8xf32> to vector<1x4x8xf32>
    %11 = vector.shape_cast %10 : vector<1x4x8xf32> to vector<4x8xf32>
    %12 = vector.extract_strided_slice %7 {offsets = [2, 0, 0], sizes = [1, 4, 8], strides = [1, 1, 1]} : vector<4x4x8xf32> to vector<1x4x8xf32>
    %13 = vector.shape_cast %12 : vector<1x4x8xf32> to vector<4x8xf32>
    %14 = vector.extract_strided_slice %7 {offsets = [3, 0, 0], sizes = [1, 4, 8], strides = [1, 1, 1]} : vector<4x4x8xf32> to vector<1x4x8xf32>
    %15 = vector.shape_cast %14 : vector<1x4x8xf32> to vector<4x8xf32>
    %16 = vector.extract_strided_slice %0 {offsets = [4, 0], sizes = [4, 8], strides = [1, 1]} : vector<36x8xf32> to vector<4x8xf32>
    %17 = vector.shape_cast %16 : vector<4x8xf32> to vector<4x1x8xf32>
    %18 = vector.shape_cast %16 : vector<4x8xf32> to vector<1x4x8xf32>
    %19 = vector.broadcast %17 : vector<4x1x8xf32> to vector<4x4x8xf32>
    %20 = vector.broadcast %18 : vector<1x4x8xf32> to vector<4x4x8xf32>
    %21 = arith.mulf %19, %20 : vector<4x4x8xf32>
    %22 = vector.extract_strided_slice %0 {offsets = [8, 0], sizes = [4, 8], strides = [1, 1]} : vector<36x8xf32> to vector<4x8xf32>
    %23 = vector.shape_cast %22 : vector<4x8xf32> to vector<4x1x8xf32>
    %24 = vector.shape_cast %22 : vector<4x8xf32> to vector<1x4x8xf32>
    %25 = vector.broadcast %23 : vector<4x1x8xf32> to vector<4x4x8xf32>
    %26 = vector.broadcast %24 : vector<1x4x8xf32> to vector<4x4x8xf32>
    %27 = arith.mulf %25, %26 : vector<4x4x8xf32>
    %28 = arith.addf %21, %27 : vector<4x4x8xf32>
    %29 = vector.extract_strided_slice %0 {offsets = [12, 0], sizes = [4, 8], strides = [1, 1]} : vector<36x8xf32> to vector<4x8xf32>
    %30 = vector.shape_cast %29 : vector<4x8xf32> to vector<4x1x8xf32>
    %31 = vector.shape_cast %29 : vector<4x8xf32> to vector<1x4x8xf32>
    %32 = vector.broadcast %30 : vector<4x1x8xf32> to vector<4x4x8xf32>
    %33 = vector.broadcast %31 : vector<1x4x8xf32> to vector<4x4x8xf32>
    %34 = arith.mulf %32, %33 : vector<4x4x8xf32>
    %35 = arith.addf %28, %34 : vector<4x4x8xf32>
    %36 = vector.extract_strided_slice %35 {offsets = [0, 0, 0], sizes = [1, 4, 8], strides = [1, 1, 1]} : vector<4x4x8xf32> to vector<1x4x8xf32>
    %37 = vector.shape_cast %36 : vector<1x4x8xf32> to vector<4x8xf32>
    %38 = vector.extract_strided_slice %35 {offsets = [1, 0, 0], sizes = [1, 4, 8], strides = [1, 1, 1]} : vector<4x4x8xf32> to vector<1x4x8xf32>
    %39 = vector.shape_cast %38 : vector<1x4x8xf32> to vector<4x8xf32>
    %40 = vector.extract_strided_slice %35 {offsets = [2, 0, 0], sizes = [1, 4, 8], strides = [1, 1, 1]} : vector<4x4x8xf32> to vector<1x4x8xf32>
    %41 = vector.shape_cast %40 : vector<1x4x8xf32> to vector<4x8xf32>
    %42 = vector.extract_strided_slice %35 {offsets = [3, 0, 0], sizes = [1, 4, 8], strides = [1, 1, 1]} : vector<4x4x8xf32> to vector<1x4x8xf32>
    %43 = vector.shape_cast %42 : vector<1x4x8xf32> to vector<4x8xf32>
    %44 = vector.extract_strided_slice %0 {offsets = [16, 0], sizes = [4, 8], strides = [1, 1]} : vector<36x8xf32> to vector<4x8xf32>
    %45 = vector.shape_cast %44 : vector<4x8xf32> to vector<4x1x8xf32>
    %46 = vector.shape_cast %44 : vector<4x8xf32> to vector<1x4x8xf32>
    %47 = vector.broadcast %45 : vector<4x1x8xf32> to vector<4x4x8xf32>
    %48 = vector.broadcast %46 : vector<1x4x8xf32> to vector<4x4x8xf32>
    %49 = arith.mulf %47, %48 : vector<4x4x8xf32>
    %50 = vector.extract_strided_slice %0 {offsets = [20, 0], sizes = [4, 8], strides = [1, 1]} : vector<36x8xf32> to vector<4x8xf32>
    %51 = vector.shape_cast %50 : vector<4x8xf32> to vector<4x1x8xf32>
    %52 = vector.shape_cast %50 : vector<4x8xf32> to vector<1x4x8xf32>
    %53 = vector.broadcast %51 : vector<4x1x8xf32> to vector<4x4x8xf32>
    %54 = vector.broadcast %52 : vector<1x4x8xf32> to vector<4x4x8xf32>
    %55 = arith.mulf %53, %54 : vector<4x4x8xf32>
    %56 = arith.addf %49, %55 : vector<4x4x8xf32>
    %57 = vector.extract_strided_slice %0 {offsets = [24, 0], sizes = [4, 8], strides = [1, 1]} : vector<36x8xf32> to vector<4x8xf32>
    %58 = vector.shape_cast %57 : vector<4x8xf32> to vector<4x1x8xf32>
    %59 = vector.shape_cast %57 : vector<4x8xf32> to vector<1x4x8xf32>
    %60 = vector.broadcast %58 : vector<4x1x8xf32> to vector<4x4x8xf32>
    %61 = vector.broadcast %59 : vector<1x4x8xf32> to vector<4x4x8xf32>
    %62 = arith.mulf %60, %61 : vector<4x4x8xf32>
    %63 = arith.addf %56, %62 : vector<4x4x8xf32>
    %64 = vector.extract_strided_slice %0 {offsets = [28, 0], sizes = [4, 8], strides = [1, 1]} : vector<36x8xf32> to vector<4x8xf32>
    %65 = vector.shape_cast %64 : vector<4x8xf32> to vector<4x1x8xf32>
    %66 = vector.shape_cast %64 : vector<4x8xf32> to vector<1x4x8xf32>
    %67 = vector.broadcast %65 : vector<4x1x8xf32> to vector<4x4x8xf32>
    %68 = vector.broadcast %66 : vector<1x4x8xf32> to vector<4x4x8xf32>
    %69 = arith.mulf %67, %68 : vector<4x4x8xf32>
    %70 = arith.addf %63, %69 : vector<4x4x8xf32>
    %71 = vector.extract_strided_slice %0 {offsets = [32, 0], sizes = [4, 8], strides = [1, 1]} : vector<36x8xf32> to vector<4x8xf32>
    %72 = vector.shape_cast %71 : vector<4x8xf32> to vector<4x1x8xf32>
    %73 = vector.shape_cast %71 : vector<4x8xf32> to vector<1x4x8xf32>
    %74 = vector.broadcast %72 : vector<4x1x8xf32> to vector<4x4x8xf32>
    %75 = vector.broadcast %73 : vector<1x4x8xf32> to vector<4x4x8xf32>
    %76 = arith.mulf %74, %75 : vector<4x4x8xf32>
    %77 = arith.addf %70, %76 : vector<4x4x8xf32>
    %78 = vector.extract_strided_slice %77 {offsets = [0, 0, 0], sizes = [1, 4, 8], strides = [1, 1, 1]} : vector<4x4x8xf32> to vector<1x4x8xf32>
    %79 = vector.shape_cast %78 : vector<1x4x8xf32> to vector<4x8xf32>
    %80 = vector.extract_strided_slice %77 {offsets = [1, 0, 0], sizes = [1, 4, 8], strides = [1, 1, 1]} : vector<4x4x8xf32> to vector<1x4x8xf32>
    %81 = vector.shape_cast %80 : vector<1x4x8xf32> to vector<4x8xf32>
    %82 = vector.extract_strided_slice %77 {offsets = [2, 0, 0], sizes = [1, 4, 8], strides = [1, 1, 1]} : vector<4x4x8xf32> to vector<1x4x8xf32>
    %83 = vector.shape_cast %82 : vector<1x4x8xf32> to vector<4x8xf32>
    %84 = vector.extract_strided_slice %77 {offsets = [3, 0, 0], sizes = [1, 4, 8], strides = [1, 1, 1]} : vector<4x4x8xf32> to vector<1x4x8xf32>
    %85 = vector.shape_cast %84 : vector<1x4x8xf32> to vector<4x8xf32>
    %86 = tpu.concatenate %1, %9, %11, %13, %15, %37, %39, %41, %43, %79, %81, %83, %85 in 0 : vector<4x8xf32>, vector<4x8xf32>, vector<4x8xf32>, vector<4x8xf32>, vector<4x8xf32>, vector<4x8xf32>, vector<4x8xf32>, vector<4x8xf32>, vector<4x8xf32>, vector<4x8xf32>, vector<4x8xf32>, vector<4x8xf32>, vector<4x8xf32> -> vector<52x8xf32>
    %c0_3 = arith.constant 0 : index
    %c0_4 = arith.constant 0 : index
    %87 = vector.load %arg2[%c0_3, %c0_4] : memref<52x8xf32, #tpu.memory_space<vmem>>, vector<52x8xf32>
    tpu.vector_store %arg2[%c0_3, %c0_4], %86 {strides = array<i32>} : memref<52x8xf32, #tpu.memory_space<vmem>>, vector<52x8xf32>,
    return
  }
}

</mosaic_0001>

<llo_original>
// kernel: tpu_custom_call.1
$region0: #{tpu_custom_call.1}
  #allocation0 [shape = 'u32[]', space=smem, size = 0x4, offset = 0x4, fixed_abs, tag = 'smem constant byte address 0x4 - core index']
  #allocation1 [shape = 'u32[144,128]{1,0:T(1,128)}', space=vmem, size = 0x12000, scoped, tag = 'internal scratch']
  %s0 = inlined_call_operand.vmem [shape: f32[4,8], index: 0, kind: input, shape index: {}]
  %s1 = inlined_call_operand.vmem [shape: f32[36,8], index: 1, kind: input, shape index: {}]
  %s2 = inlined_call_operand.vmem [shape: f32[52,8], index: 2, kind: output, shape index: {}]
  %s3 = sld [smem:[#allocation0]]
  $region18: #{tpu_custom_call.1} parent=0
    _
  %s5 = ssub.s32 1, %s3
  %s6 = scalar_select 0, %s5, %s3
  // Predicated region
  $region2: #{tpu_custom_call.1} parent=0 // pred_check
    _
  $region3: #{tpu_custom_call.1} parent=0 // pred_check_branch
    %8 = sbr.rel (0) target = $region5
  $region4: #{tpu_custom_call.1} parent=0 // pred_region
    _
  $region5: #{tpu_custom_call.1} parent=0 // pred_fallthru
    _
  // Predicated region
  $region6: #{tpu_custom_call.1} parent=0 // pred_check
    _
  $region7: #{tpu_custom_call.1} parent=0 // pred_check_branch
    %10 = sbr.rel (0) target = $region9
  $region8: #{tpu_custom_call.1} parent=0 // pred_region
    _
  $region9: #{tpu_custom_call.1} parent=0 // pred_fallthru
    _
  %v11 = vld [vmem:[%s1] sm:$0xff]
  %v12 = vld [vmem:[%s1 + $0x8] sm:$0xff]
  %v13 = vld [vmem:[%s1 + $0x10] sm:$0xff]
  %v14 = vld [vmem:[%s1 + $0x18] sm:$0xff]
  %v15 = vld [vmem:[%s1 + $0x20] sm:$0xf]
  %v16 = vld [vmem:[%s0] sm:$0xf]
  %v19 = vunpack.c.l.s4 1966171168
  %v20 = vunpack.c.0.s8 %v19
  %v21 = vlaneseq
  %v22 = vshrl.u32 %v21, 7
  %v23 = vsub.s32 %v20, %v22
  %v24 = vrot.slane %v11, %v23
  %v25 = vcombine.high %v24, %v24
  %v27 = vunpack.c.l.s4 1966171168
  %v28 = vunpack.c.0.s8 %v27
  %v29 = vlaneseq
  %v30 = vshrl.u32 %v29, 7
  %v31 = vsub.s32 %v28, %v30
  %v32 = vrot.slane %v24, %v31
  %v34 = vunpack.c.l.s4 1966171168
  %v35 = vunpack.c.0.s8 %v34
  %v36 = vlaneseq
  %v37 = vshrl.u32 %v36, 7
  %v38 = vsub.s32 %v35, %v37
  %v39 = vrot.slane %v25, %v38
  %v40 = vcombine.high %v32, %v32
  %v41 = vcombine.high %v39, %v39
  %v42 = vlaneseq
  %v43 = vshrl.u32 %v42, 7
  %v44 = vsub.s32 0, %v43
  %v45 = vrot.slane %v32, %v44
  %v46 = vlaneseq
  %v47 = vshrl.u32 %v46, 7
  %v48 = vsub.s32 0, %v47
  %v49 = vrot.slane %v39, %v48
  %v50 = vlaneseq
  %v51 = vshrl.u32 %v50, 7
  %v52 = vsub.s32 0, %v51
  %v53 = vrot.slane %v40, %v52
  %v54 = vlaneseq
  %v55 = vshrl.u32 %v54, 7
  %v56 = vsub.s32 0, %v55
  %v57 = vrot.slane %v41, %v56
  %v62 = vmul.f32 %v45, %v11
  %v63 = vmul.f32 %v49, %v11
  %v64 = vmul.f32 %v53, %v11
  %v65 = vmul.f32 %v57, %v11
  %v66 = vcombine.high %v11, %v11
  %v68 = vunpack.c.l.s4 1966171168
  %v69 = vunpack.c.0.s8 %v68
  %v70 = vlaneseq
  %v71 = vshrl.u32 %v70, 7
  %v72 = vsub.s32 %v69, %v71
  %v73 = vrot.slane %v66, %v72
  %v74 = vcombine.high %v73, %v73
  %v76 = vunpack.c.l.s4 1966171168
  %v77 = vunpack.c.0.s8 %v76
  %v78 = vlaneseq
  %v79 = vshrl.u32 %v78, 7
  %v80 = vsub.s32 %v77, %v79
  %v81 = vrot.slane %v73, %v80
  %v83 = vunpack.c.l.s4 1966171168
  %v84 = vunpack.c.0.s8 %v83
  %v85 = vlaneseq
  %v86 = vshrl.u32 %v85, 7
  %v87 = vsub.s32 %v84, %v86
  %v88 = vrot.slane %v74, %v87
  %v89 = vcombine.high %v81, %v81
  %v90 = vcombine.high %v88, %v88
  %v91 = vlaneseq
  %v92 = vshrl.u32 %v91, 7
  %v93 = vsub.s32 0, %v92
  %v94 = vrot.slane %v81, %v93
  %v95 = vlaneseq
  %v96 = vshrl.u32 %v95, 7
  %v97 = vsub.s32 0, %v96
  %v98 = vrot.slane %v88, %v97
  %v99 = vlaneseq
  %v100 = vshrl.u32 %v99, 7
  %v101 = vsub.s32 0, %v100
  %v102 = vrot.slane %v89, %v101
  %v103 = vlaneseq
  %v104 = vshrl.u32 %v103, 7
  %v105 = vsub.s32 0, %v104
  %v106 = vrot.slane %v90, %v105
  %v111 = vmul.f32 %v94, %v11
  %v112 = vmul.f32 %v98, %v11
  %v113 = vmul.f32 %v102, %v11
  %v114 = vmul.f32 %v106, %v11
  %v117 = vunpack.c.l.s4 1966171168
  %v118 = vunpack.c.0.s8 %v117
  %v119 = vlaneseq
  %v120 = vshrl.u32 %v119, 7
  %v121 = vsub.s32 %v118, %v120
  %v122 = vrot.slane %v12, %v121
  %v123 = vcombine.high %v122, %v122
  %v125 = vunpack.c.l.s4 1966171168
  %v126 = vunpack.c.0.s8 %v125
  %v127 = vlaneseq
  %v128 = vshrl.u32 %v127, 7
  %v129 = vsub.s32 %v126, %v128
  %v130 = vrot.slane %v122, %v129
  %v132 = vunpack.c.l.s4 1966171168
  %v133 = vunpack.c.0.s8 %v132
  %v134 = vlaneseq
  %v135 = vshrl.u32 %v134, 7
  %v136 = vsub.s32 %v133, %v135
  %v137 = vrot.slane %v123, %v136
  %v138 = vcombine.high %v130, %v130
  %v139 = vcombine.high %v137, %v137
  %v140 = vlaneseq
  %v141 = vshrl.u32 %v140, 7
  %v142 = vsub.s32 0, %v141
  %v143 = vrot.slane %v130, %v142
  %v144 = vlaneseq
  %v145 = vshrl.u32 %v144, 7
  %v146 = vsub.s32 0, %v145
  %v147 = vrot.slane %v137, %v146
  %v148 = vlaneseq
  %v149 = vshrl.u32 %v148, 7
  %v150 = vsub.s32 0, %v149
  %v151 = vrot.slane %v138, %v150
  %v152 = vlaneseq
  %v153 = vshrl.u32 %v152, 7
  %v154 = vsub.s32 0, %v153
  %v155 = vrot.slane %v139, %v154
  %v160 = vmul.f32 %v143, %v12
  %v161 = vmul.f32 %v147, %v12
  %v162 = vmul.f32 %v151, %v12
  %v163 = vmul.f32 %v155, %v12
  %v168 = vrot.slane %v160, 4
  %v169 = vrot.slane %v161, 4
  %v170 = vrot.slane %v162, 4
  %v171 = vrot.slane %v163, 4
  %v176 = vadd.f32 %v111, %v168
  %v177 = vadd.f32 %v112, %v169
  %v178 = vadd.f32 %v113, %v170
  %v179 = vadd.f32 %v114, %v171
  %v180 = vcombine.high %v12, %v12
  %v182 = vunpack.c.l.s4 1966171168
  %v183 = vunpack.c.0.s8 %v182
  %v184 = vlaneseq
  %v185 = vshrl.u32 %v184, 7
  %v186 = vsub.s32 %v183, %v185
  %v187 = vrot.slane %v180, %v186
  %v188 = vcombine.high %v187, %v187
  %v190 = vunpack.c.l.s4 1966171168
  %v191 = vunpack.c.0.s8 %v190
  %v192 = vlaneseq
  %v193 = vshrl.u32 %v192, 7
  %v194 = vsub.s32 %v191, %v193
  %v195 = vrot.slane %v187, %v194
  %v197 = vunpack.c.l.s4 1966171168
  %v198 = vunpack.c.0.s8 %v197
  %v199 = vlaneseq
  %v200 = vshrl.u32 %v199, 7
  %v201 = vsub.s32 %v198, %v200
  %v202 = vrot.slane %v188, %v201
  %v203 = vcombine.high %v195, %v195
  %v204 = vcombine.high %v202, %v202
  %v205 = vlaneseq
  %v206 = vshrl.u32 %v205, 7
  %v207 = vsub.s32 0, %v206
  %v208 = vrot.slane %v195, %v207
  %v209 = vlaneseq
  %v210 = vshrl.u32 %v209, 7
  %v211 = vsub.s32 0, %v210
  %v212 = vrot.slane %v202, %v211
  %v213 = vlaneseq
  %v214 = vshrl.u32 %v213, 7
  %v215 = vsub.s32 0, %v214
  %v216 = vrot.slane %v203, %v215
  %v217 = vlaneseq
  %v218 = vshrl.u32 %v217, 7
  %v219 = vsub.s32 0, %v218
  %v220 = vrot.slane %v204, %v219
  %v225 = vmul.f32 %v208, %v12
  %v226 = vmul.f32 %v212, %v12
  %v227 = vmul.f32 %v216, %v12
  %v228 = vmul.f32 %v220, %v12
  %v229 = vadd.f32 %v176, %v225
  %v230 = vadd.f32 %v177, %v226
  %v231 = vadd.f32 %v178, %v227
  %v232 = vadd.f32 %v179, %v228
  %v235 = vunpack.c.l.s4 1966171168
  %v236 = vunpack.c.0.s8 %v235
  %v237 = vlaneseq
  %v238 = vshrl.u32 %v237, 7
  %v239 = vsub.s32 %v236, %v238
  %v240 = vrot.slane %v13, %v239
  %v241 = vcombine.high %v240, %v240
  %v243 = vunpack.c.l.s4 1966171168
  %v244 = vunpack.c.0.s8 %v243
  %v245 = vlaneseq
  %v246 = vshrl.u32 %v245, 7
  %v247 = vsub.s32 %v244, %v246
  %v248 = vrot.slane %v240, %v247
  %v250 = vunpack.c.l.s4 1966171168
  %v251 = vunpack.c.0.s8 %v250
  %v252 = vlaneseq
  %v253 = vshrl.u32 %v252, 7
  %v254 = vsub.s32 %v251, %v253
  %v255 = vrot.slane %v241, %v254
  %v256 = vcombine.high %v248, %v248
  %v257 = vcombine.high %v255, %v255
  %v258 = vlaneseq
  %v259 = vshrl.u32 %v258, 7
  %v260 = vsub.s32 0, %v259
  %v261 = vrot.slane %v248, %v260
  %v262 = vlaneseq
  %v263 = vshrl.u32 %v262, 7
  %v264 = vsub.s32 0, %v263
  %v265 = vrot.slane %v255, %v264
  %v266 = vlaneseq
  %v267 = vshrl.u32 %v266, 7
  %v268 = vsub.s32 0, %v267
  %v269 = vrot.slane %v256, %v268
  %v270 = vlaneseq
  %v271 = vshrl.u32 %v270, 7
  %v272 = vsub.s32 0, %v271
  %v273 = vrot.slane %v257, %v272
  %v278 = vmul.f32 %v261, %v13
  %v279 = vmul.f32 %v265, %v13
  %v280 = vmul.f32 %v269, %v13
  %v281 = vmul.f32 %v273, %v13
  %v282 = vcombine.high %v13, %v13
  %v284 = vunpack.c.l.s4 1966171168
  %v285 = vunpack.c.0.s8 %v284
  %v286 = vlaneseq
  %v287 = vshrl.u32 %v286, 7
  %v288 = vsub.s32 %v285, %v287
  %v289 = vrot.slane %v282, %v288
  %v290 = vcombine.high %v289, %v289
  %v292 = vunpack.c.l.s4 1966171168
  %v293 = vunpack.c.0.s8 %v292
  %v294 = vlaneseq
  %v295 = vshrl.u32 %v294, 7
  %v296 = vsub.s32 %v293, %v295
  %v297 = vrot.slane %v289, %v296
  %v299 = vunpack.c.l.s4 1966171168
  %v300 = vunpack.c.0.s8 %v299
  %v301 = vlaneseq
  %v302 = vshrl.u32 %v301, 7
  %v303 = vsub.s32 %v300, %v302
  %v304 = vrot.slane %v290, %v303
  %v305 = vcombine.high %v297, %v297
  %v306 = vcombine.high %v304, %v304
  %v307 = vlaneseq
  %v308 = vshrl.u32 %v307, 7
  %v309 = vsub.s32 0, %v308
  %v310 = vrot.slane %v297, %v309
  %v311 = vlaneseq
  %v312 = vshrl.u32 %v311, 7
  %v313 = vsub.s32 0, %v312
  %v314 = vrot.slane %v304, %v313
  %v315 = vlaneseq
  %v316 = vshrl.u32 %v315, 7
  %v317 = vsub.s32 0, %v316
  %v318 = vrot.slane %v305, %v317
  %v319 = vlaneseq
  %v320 = vshrl.u32 %v319, 7
  %v321 = vsub.s32 0, %v320
  %v322 = vrot.slane %v306, %v321
  %v327 = vmul.f32 %v310, %v13
  %v328 = vmul.f32 %v314, %v13
  %v329 = vmul.f32 %v318, %v13
  %v330 = vmul.f32 %v322, %v13
  %v335 = vrot.slane %v327, 4
  %v336 = vrot.slane %v328, 4
  %v337 = vrot.slane %v329, 4
  %v338 = vrot.slane %v330, 4
  %v343 = vadd.f32 %v278, %v335
  %v344 = vadd.f32 %v279, %v336
  %v345 = vadd.f32 %v280, %v337
  %v346 = vadd.f32 %v281, %v338
  %v349 = vunpack.c.l.s4 1966171168
  %v350 = vunpack.c.0.s8 %v349
  %v351 = vlaneseq
  %v352 = vshrl.u32 %v351, 7
  %v353 = vsub.s32 %v350, %v352
  %v354 = vrot.slane %v14, %v353
  %v355 = vcombine.high %v354, %v354
  %v357 = vunpack.c.l.s4 1966171168
  %v358 = vunpack.c.0.s8 %v357
  %v359 = vlaneseq
  %v360 = vshrl.u32 %v359, 7
  %v361 = vsub.s32 %v358, %v360
  %v362 = vrot.slane %v354, %v361
  %v364 = vunpack.c.l.s4 1966171168
  %v365 = vunpack.c.0.s8 %v364
  %v366 = vlaneseq
  %v367 = vshrl.u32 %v366, 7
  %v368 = vsub.s32 %v365, %v367
  %v369 = vrot.slane %v355, %v368
  %v370 = vcombine.high %v362, %v362
  %v371 = vcombine.high %v369, %v369
  %v372 = vlaneseq
  %v373 = vshrl.u32 %v372, 7
  %v374 = vsub.s32 0, %v373
  %v375 = vrot.slane %v362, %v374
  %v376 = vlaneseq
  %v377 = vshrl.u32 %v376, 7
  %v378 = vsub.s32 0, %v377
  %v379 = vrot.slane %v369, %v378
  %v380 = vlaneseq
  %v381 = vshrl.u32 %v380, 7
  %v382 = vsub.s32 0, %v381
  %v383 = vrot.slane %v370, %v382
  %v384 = vlaneseq
  %v385 = vshrl.u32 %v384, 7
  %v386 = vsub.s32 0, %v385
  %v387 = vrot.slane %v371, %v386
  %v392 = vmul.f32 %v375, %v14
  %v393 = vmul.f32 %v379, %v14
  %v394 = vmul.f32 %v383, %v14
  %v395 = vmul.f32 %v387, %v14
  %v396 = vadd.f32 %v343, %v392
  %v397 = vadd.f32 %v344, %v393
  %v398 = vadd.f32 %v345, %v394
  %v399 = vadd.f32 %v346, %v395
  %v400 = vcombine.high %v14, %v14
  %v402 = vunpack.c.l.s4 1966171168
  %v403 = vunpack.c.0.s8 %v402
  %v404 = vlaneseq
  %v405 = vshrl.u32 %v404, 7
  %v406 = vsub.s32 %v403, %v405
  %v407 = vrot.slane %v400, %v406
  %v408 = vcombine.high %v407, %v407
  %v410 = vunpack.c.l.s4 1966171168
  %v411 = vunpack.c.0.s8 %v410
  %v412 = vlaneseq
  %v413 = vshrl.u32 %v412, 7
  %v414 = vsub.s32 %v411, %v413
  %v415 = vrot.slane %v407, %v414
  %v417 = vunpack.c.l.s4 1966171168
  %v418 = vunpack.c.0.s8 %v417
  %v419 = vlaneseq
  %v420 = vshrl.u32 %v419, 7
  %v421 = vsub.s32 %v418, %v420
  %v422 = vrot.slane %v408, %v421
  %v423 = vcombine.high %v415, %v415
  %v424 = vcombine.high %v422, %v422
  %v425 = vlaneseq
  %v426 = vshrl.u32 %v425, 7
  %v427 = vsub.s32 0, %v426
  %v428 = vrot.slane %v415, %v427
  %v429 = vlaneseq
  %v430 = vshrl.u32 %v429, 7
  %v431 = vsub.s32 0, %v430
  %v432 = vrot.slane %v422, %v431
  %v433 = vlaneseq
  %v434 = vshrl.u32 %v433, 7
  %v435 = vsub.s32 0, %v434
  %v436 = vrot.slane %v423, %v435
  %v437 = vlaneseq
  %v438 = vshrl.u32 %v437, 7
  %v439 = vsub.s32 0, %v438
  %v440 = vrot.slane %v424, %v439
  %v445 = vmul.f32 %v428, %v14
  %v446 = vmul.f32 %v432, %v14
  %v447 = vmul.f32 %v436, %v14
  %v448 = vmul.f32 %v440, %v14
  %v453 = vrot.slane %v445, 4
  %v454 = vrot.slane %v446, 4
  %v455 = vrot.slane %v447, 4
  %v456 = vrot.slane %v448, 4
  %v461 = vadd.f32 %v396, %v453
  %v462 = vadd.f32 %v397, %v454
  %v463 = vadd.f32 %v398, %v455
  %v464 = vadd.f32 %v399, %v456
  %v467 = vunpack.c.l.s4 1966171168
  %v468 = vunpack.c.0.s8 %v467
  %v469 = vlaneseq
  %v470 = vshrl.u32 %v469, 7
  %v471 = vsub.s32 %v468, %v470
  %v472 = vrot.slane %v15, %v471
  %v473 = vcombine.high %v472, %v472
  %v475 = vunpack.c.l.s4 1966171168
  %v476 = vunpack.c.0.s8 %v475
  %v477 = vlaneseq
  %v478 = vshrl.u32 %v477, 7
  %v479 = vsub.s32 %v476, %v478
  %v480 = vrot.slane %v472, %v479
  %v482 = vunpack.c.l.s4 1966171168
  %v483 = vunpack.c.0.s8 %v482
  %v484 = vlaneseq
  %v485 = vshrl.u32 %v484, 7
  %v486 = vsub.s32 %v483, %v485
  %v487 = vrot.slane %v473, %v486
  %v488 = vcombine.high %v480, %v480
  %v489 = vcombine.high %v487, %v487
  %v490 = vlaneseq
  %v491 = vshrl.u32 %v490, 7
  %v492 = vsub.s32 0, %v491
  %v493 = vrot.slane %v480, %v492
  %v494 = vlaneseq
  %v495 = vshrl.u32 %v494, 7
  %v496 = vsub.s32 0, %v495
  %v497 = vrot.slane %v487, %v496
  %v498 = vlaneseq
  %v499 = vshrl.u32 %v498, 7
  %v500 = vsub.s32 0, %v499
  %v501 = vrot.slane %v488, %v500
  %v502 = vlaneseq
  %v503 = vshrl.u32 %v502, 7
  %v504 = vsub.s32 0, %v503
  %v505 = vrot.slane %v489, %v504
  %v510 = vmul.f32 %v493, %v15
  %v511 = vmul.f32 %v497, %v15
  %v512 = vmul.f32 %v501, %v15
  %v513 = vmul.f32 %v505, %v15
  %v514 = vadd.f32 %v461, %v510
  %v515 = vadd.f32 %v462, %v511
  %v516 = vadd.f32 %v463, %v512
  %v517 = vadd.f32 %v464, %v513
  %v519 = vrot.slane %v62, 4
  %v522 = vrot.slane %v64, 4
  %v525 = vrot.slane %v230, 4
  %v528 = vrot.slane %v232, 4
  %v531 = vrot.slane %v514, 4
  %v534 = vrot.slane %v516, 4
  %vm536 = vcmask 1043456
  %v537 = vsel %vm536, %v16, %v519
  %v538 = vsel %vm536, %v63, %v522
  %v539 = vsel %vm536, %v65, %v229
  %v540 = vsel %vm536, %v525, %v231
  %v541 = vsel %vm536, %v528, %v531
  %v542 = vsel %vm536, %v515, %v534
  %vm543 = vcmask 64512
  %544 = vst.msk [vmem:[%s2] sm:$0xff] %vm543, %v537
  %545 = vst.msk [vmem:[%s2 + $0x8] sm:$0xff] %vm543, %v538
  %546 = vst.msk [vmem:[%s2 + $0x10] sm:$0xff] %vm543, %v539
  %547 = vst.msk [vmem:[%s2 + $0x18] sm:$0xff] %vm543, %v540
  %548 = vst.msk [vmem:[%s2 + $0x20] sm:$0xff] %vm543, %v541
  %549 = vst.msk [vmem:[%s2 + $0x28] sm:$0xff] %vm543, %v542
  %vm550 = vcmask 60416
  %551 = vst.msk [vmem:[%s2 + $0x30] sm:$0xf] %vm550, %v517
  // Predicated region
  $region10: #{tpu_custom_call.1} parent=0 // pred_check
    _
  $region11: #{tpu_custom_call.1} parent=0 // pred_check_branch
    %553 = sbr.rel (0) target = $region13
  $region12: #{tpu_custom_call.1} parent=0 // pred_region
    _
  $region13: #{tpu_custom_call.1} parent=0 // pred_fallthru
    _
  // Predicated region
  $region14: #{tpu_custom_call.1} parent=0 // pred_check
    _
  $region15: #{tpu_custom_call.1} parent=0 // pred_check_branch
    %555 = sbr.rel (0) target = $region17
  $region16: #{tpu_custom_call.1} parent=0 // pred_region
    _
  $region17: #{tpu_custom_call.1} parent=0 // pred_fallthru
    _

</llo_original>
